<compile_context>
chip_gen: v6e
topology: v6e:2x2x1
jax: 0.10.0
libtpu: 0.0.40
codegen_flags: <defaults>
</compile_context>

<pallas_src>
import functools

import jax
import jax.numpy as jnp
from jax.experimental import pallas as pl
from jax.experimental.pallas import tpu as pltpu

BN_EPS = 1e-5
MM_DTYPE = jnp.bfloat16   # matmul input dtype (set to jnp.float32 for exact f32 conv)
ROW_TILE = 128            # target rows/grid-step for flat (M, C) kernels.  Small so the
                          # multi-tile path is exercised at demo sizes; production would
                          # use 512-1024 rows (measured ~85% HBM roofline at 512).
H_TILE = 8                # output image rows per grid step for the KxK conv kernel.


def _pick_tile(m, target):
    """Largest divisor of m that is <= target (so the grid divides evenly)."""
    if m <= target:
        return m
    for t in range(target, 0, -1):
        if m % t == 0:
            return t
    return m


def _vmem_limit(block_bytes):
    """Explicit scoped-VMEM budget: generous headroom over the double-buffered block set."""
    return int(min(64 * 1024 * 1024, max(8 * 1024 * 1024, 6 * block_bytes)))


# ----------------------------------------------------------------------------
# Kernel 1: fused 1x1 CoordConvs of every branch -> one matmul (+ partial BN stats)
# ----------------------------------------------------------------------------
@functools.lru_cache(maxsize=None)
def _build_conv1x1_fused(m, cin, cout, tm):
    nt = m // tm

    def kernel(x_ref, w_ref, wc_ref, cc_ref, y_ref, st_ref):
        # x_ref : (tm, cin)  bf16      w_ref : (cin, cout) bf16
        # wc_ref: (2, cout)  f32       cc_ref: (tm, 2) f32   [xx, yy] per pixel
        # y_ref : (tm, cout) f32       st_ref: (2, cout) f32  per-tile [sum, sum of sq]
        y = jnp.dot(x_ref[...], w_ref[...], preferred_element_type=jnp.float32)
        # CoordConv coordinate channels as rank-1 updates on the VPU (kept out of the MXU K).
        cc = cc_ref[...]
        y = y + cc[:, 0:1] * wc_ref[0:1, :] + cc[:, 1:2] * wc_ref[1:2, :]
        # conv bias omitted on purpose: BatchNorm(affine=False) cancels it exactly.
        y_ref[...] = y
        st_ref[0:1, :] = jnp.sum(y, axis=0, keepdims=True)
        st_ref[1:2, :] = jnp.sum(y * y, axis=0, keepdims=True)

    blk = 2 * (tm * cin * 2 + cin * cout * 2 + 2 * cout * 4 + tm * 2 * 4
               + tm * cout * 4 + 2 * cout * 4)
    return jax.jit(pl.pallas_call(
        kernel,
        grid=(nt,),
        in_specs=[
            pl.BlockSpec((tm, cin), lambda i: (i, 0)),
            pl.BlockSpec((cin, cout), lambda i: (0, 0)),
            pl.BlockSpec((2, cout), lambda i: (0, 0)),
            pl.BlockSpec((tm, 2), lambda i: (i, 0)),
        ],
        out_specs=(
            pl.BlockSpec((tm, cout), lambda i: (i, 0)),
            pl.BlockSpec((None, 2, cout), lambda i: (i, 0, 0)),
        ),
        out_shape=(
            jax.ShapeDtypeStruct((m, cout), jnp.float32),
            jax.ShapeDtypeStruct((nt, 2, cout), jnp.float32),
        ),
        compiler_params=pltpu.CompilerParams(
            dimension_semantics=("parallel",),
            vmem_limit_bytes=_vmem_limit(blk)),
    ))


# ----------------------------------------------------------------------------
# Kernel 2: BatchNorm(affine=False, training stats) + ReLU over flat (M, C)
# ----------------------------------------------------------------------------
@functools.lru_cache(maxsize=None)
def _build_bn_relu(m, c, tm):
    nt = m // tm

    def kernel(y_ref, p_ref, o_ref):
        # p_ref: (2, c) = [mean, rstd]
        o_ref[...] = jnp.maximum((y_ref[...] - p_ref[0:1, :]) * p_ref[1:2, :], 0.0)

    blk = 2 * (tm * c * 4 + 2 * c * 4 + tm * c * 4)
    return jax.jit(pl.pallas_call(
        kernel,
        grid=(nt,),
        in_specs=[pl.BlockSpec((tm, c), lambda i: (i, 0)),
                  pl.BlockSpec((2, c), lambda i: (0, 0))],
        out_specs=pl.BlockSpec((tm, c), lambda i: (i, 0)),
        out_shape=jax.ShapeDtypeStruct((m, c), jnp.float32),
        compiler_params=pltpu.CompilerParams(
            dimension_semantics=("parallel",),
            vmem_limit_bytes=_vmem_limit(blk)),
    ))


# ----------------------------------------------------------------------------
# Kernel 3: KxK conv over a zero-padded NHWC image (no im2col in HBM) + partial BN stats
# ----------------------------------------------------------------------------
@functools.lru_cache(maxsize=None)
def _build_conv_kxk(n, h, w, c_in, c_out, k, th):
    pad = (k - 1) // 2
    hp, wp = h + 2 * pad, w + 2 * pad
    n_ht = h // th
    kk = k * k

    def kernel(x_ref, w_ref, o_ref, st_ref):
        # x_ref : (hp, wp, c_in) bf16 (whole padded image of one batch element, halo source)
        # w_ref : (k*k, c_in, c_out) bf16
        # o_ref : (th, w, c_out) f32        st_ref: (2, c_out) f32 partial stats
        row0 = pl.program_id(1) * th

        def body(r, carry):
            s1, s2 = carry
            acc = jnp.zeros((w, c_out), jnp.float32)
            for ki in range(k):                      # unrolled: k row loads
                row = x_ref[row0 + r + ki]           # (wp, c_in)
                for kj in range(k):                  # k shifted-slice matmuls
                    acc = acc + jnp.dot(row[kj:kj + w, :], w_ref[ki * k + kj],
                                        preferred_element_type=jnp.float32)
            o_ref[r] = acc
            s1 = s1 + jnp.sum(acc, axis=0, keepdims=True)
            s2 = s2 + jnp.sum(acc * acc, axis=0, keepdims=True)
            return s1, s2

        z = jnp.zeros((1, c_out), jnp.float32)
        s1, s2 = jax.lax.fori_loop(0, th, body, (z, z))
        st_ref[0:1, :] = s1
        st_ref[1:2, :] = s2

    blk = 2 * (hp * wp * c_in * 2 + kk * c_in * c_out * 2
               + th * w * c_out * 4 + 2 * c_out * 4)
    return jax.jit(pl.pallas_call(
        kernel,
        grid=(n, n_ht),
        in_specs=[
            pl.BlockSpec((None, hp, wp, c_in), lambda b, i: (b, 0, 0, 0)),
            pl.BlockSpec((kk, c_in, c_out), lambda b, i: (0, 0, 0)),
        ],
        out_specs=(
            pl.BlockSpec((None, th, w, c_out), lambda b, i: (b, i, 0, 0)),
            pl.BlockSpec((None, 2, c_out), lambda b, i: (b * n_ht + i, 0, 0)),
        ),
        out_shape=(
            jax.ShapeDtypeStruct((n, h, w, c_out), jnp.float32),
            jax.ShapeDtypeStruct((n * n_ht, 2, c_out), jnp.float32),
        ),
        compiler_params=pltpu.CompilerParams(
            dimension_semantics=("parallel", "parallel"),
            vmem_limit_bytes=_vmem_limit(blk)),
    ))


# ----------------------------------------------------------------------------
# Glue: BN stat finalize, coords, pooling, bilinear upsample
# ----------------------------------------------------------------------------
def _finalize_bn(partial_stats, m):
    """Combine per-tile [sum, sum_sq] -> per-channel (mean, rstd) (biased var, eps=1e-5)."""
    s = partial_stats.reshape(-1, 2, partial_stats.shape[-1]).sum(axis=0)
    mean = s[0] / m
    var = jnp.maximum(s[1] / m - mean * mean, 0.0)
    rstd = jax.lax.rsqrt(var + BN_EPS)
    return jnp.stack([mean, rstd], axis=0)          # (2, C)


def _coord_channels(n, h, w):
    # xx varies along width, yy along height, normalized to [-1, 1].
    # (guard the degenerate 1-pixel case, which divides by zero in the original)
    xx = jnp.arange(w, dtype=jnp.float32) * (2.0 / max(w - 1, 1)) - 1.0
    yy = jnp.arange(h, dtype=jnp.float32) * (2.0 / max(h - 1, 1)) - 1.0
    cc = jnp.stack([jnp.broadcast_to(xx[None, :], (h, w)),
                    jnp.broadcast_to(yy[:, None], (h, w))], axis=-1)   # (h, w, 2)
    return jnp.broadcast_to(cc[None], (n, h, w, 2))


def avg_pool2(x):                                   # NHWC AvgPool2d(2)
    n, h, w, c = x.shape
    return x.reshape(n, h // 2, 2, w // 2, 2, c).mean(axis=(2, 4))


# TODO(synk): AvgPool2d / UpsamplingBilinear2d stay as plain-JAX glue (thin data
# movement); they could be folded into a Pallas pre/post pass if ever hot.
def upsample_bilinear_x2(x):                        # NHWC, align_corners=True (PyTorch UpsamplingBilinear2d)
    n, h, w, c = x.shape
    ho, wo = 2 * h, 2 * w

    def grid(out_sz, in_sz):
        if in_sz == 1:
            z = jnp.zeros((out_sz,), jnp.int32)
            return z, z, jnp.zeros((out_sz,), jnp.float32)
        pos = jnp.arange(out_sz, dtype=jnp.float32) * ((in_sz - 1) / (out_sz - 1))
        i0 = jnp.clip(jnp.floor(pos).astype(jnp.int32), 0, in_sz - 2)
        return i0, i0 + 1, pos - i0.astype(jnp.float32)

    h0, h1, fh = grid(ho, h)
    w0, w1, fw = grid(wo, w)
    xh0, xh1 = x[:, h0], x[:, h1]
    fw_ = fw[None, None, :, None]
    top = xh0[:, :, w0] * (1.0 - fw_) + xh0[:, :, w1] * fw_
    bot = xh1[:, :, w0] * (1.0 - fw_) + xh1[:, :, w1] * fw_
    fh_ = fh[None, :, None, None]
    return top * (1.0 - fh_) + bot * fh_


# ----------------------------------------------------------------------------
# inception: params + forward
# ----------------------------------------------------------------------------
def _uniform(key, shape, fan_in):
    bound = fan_in ** -0.5
    return jax.random.uniform(key, shape, jnp.float32, -bound, bound)


def make_inception(key, input_size, config):
    """Parameters for inception(input_size, config).  HWIO weights, no biases
    (BatchNorm(affine=False) makes conv biases an exact no-op)."""
    n_b = len(config)
    keys = jax.random.split(key, 2 * n_b)
    wx_parts, wc_parts, branch_w = [], [], []
    couts = [config[0][0]] + [c[1] for c in config[1:]]
    for i, cout in enumerate(couts):
        wfull = _uniform(keys[2 * i], (input_size + 2, cout), input_size + 2)
        wx_parts.append(wfull[:input_size])         # plain input channels
        wc_parts.append(wfull[input_size:])         # [xx, yy] rows
    for i in range(1, n_b):
        k, out_a, out_b = config[i]
        branch_w.append(_uniform(keys[2 * i + 1], (k, k, out_a + 2, out_b),
                                 k * k * (out_a + 2)))
    return {
        "cfg": tuple(tuple(c) for c in config),
        "w1": jnp.concatenate(wx_parts, axis=1),    # (Cin, c0 + sum(out_a))
        "wc": jnp.concatenate(wc_parts, axis=1),    # (2,   c0 + sum(out_a))
        "w2": branch_w,                             # [(k, k, out_a+2, out_b)]
    }


def apply_inception(x_nhwc, mod):
    cfg = mod["cfg"]
    n, h, w, cin = x_nhwc.shape
    m = n * h * w
    tm = _pick_tile(m, ROW_TILE)
    c0 = cfg[0][0]
    c1 = mod["w1"].shape[1]

    coords = _coord_channels(n, h, w)                       # (n, h, w, 2) f32
    cc_flat = coords.reshape(m, 2)

    # --- stage 1: all 1x1 CoordConvs of all branches as one lane-dense matmul ---
    conv1 = _build_conv1x1_fused(m, cin, c1, tm)
    y1, st1 = conv1(x_nhwc.reshape(m, cin).astype(MM_DTYPE),
                    mod["w1"].astype(MM_DTYPE), mod["wc"], cc_flat)
    p1 = _finalize_bn(st1, m)
    h1 = _build_bn_relu(m, c1, tm)(y1, p1)                  # (m, c1) f32, BN+ReLU done

    # --- stage 2: per-branch KxK CoordConv (halo-tiled, no HBM im2col) ---
    y2_list, p2_list = [], []
    off = c0
    for i in range(1, len(cfg)):
        k, out_a, out_b = cfg[i]
        hb = h1[:, off:off + out_a].reshape(n, h, w, out_a)
        off += out_a
        hb = jnp.concatenate([hb, coords], axis=-1)         # CoordConv input [h, xx, yy]
        pad = (k - 1) // 2
        xp = jnp.pad(hb, ((0, 0), (pad, pad), (pad, pad), (0, 0))).astype(MM_DTYPE)
        w2 = mod["w2"][i - 1].reshape(k * k, out_a + 2, out_b).astype(MM_DTYPE)
        th = _pick_tile(h, H_TILE)
        y2, st2 = _build_conv_kxk(n, h, w, out_a + 2, out_b, k, th)(xp, w2)
        y2_list.append(y2.reshape(m, out_b))
        p2_list.append(_finalize_bn(st2, m))

    # one fused normalize+ReLU over the concatenated KxK outputs (denser lanes, 1 launch)
    y2_all = jnp.concatenate(y2_list, axis=-1)
    p2_all = jnp.concatenate(p2_list, axis=-1)
    h2 = _build_bn_relu(m, y2_all.shape[-1], tm)(y2_all, p2_all)

    return jnp.concatenate([h1[:, :c0], h2], axis=-1).reshape(n, h, w, -1)


# ----------------------------------------------------------------------------
# Channels1 / Channels2 / Channels3 composition
# ----------------------------------------------------------------------------
CFG_STD64 = ((64,), (3, 32, 64), (5, 32, 64), (7, 32, 64))
CFG_64_11 = ((64,), (3, 64, 64), (7, 64, 64), (11, 64, 64))
CFG_STD32 = ((32,), (3, 32, 32), (5, 32, 32), (7, 32, 32))
CFG_32_11 = ((32,), (3, 64, 32), (7, 64, 32), (11, 64, 32))


def init_channels1(key):
    ks = jax.random.split(key, 5)
    return {"b0": [make_inception(ks[0], 256, CFG_STD64),
                   make_inception(ks[1], 256, CFG_STD64)],
            "b1": [make_inception(ks[2], 256, CFG_STD64),
                   make_inception(ks[3], 256, CFG_STD64),
                   make_inception(ks[4], 256, CFG_STD64)]}


def channels1_forward(x, p):
    y0 = x
    for m in p["b0"]:
        y0 = apply_inception(y0, m)
    y1 = avg_pool2(x)
    for m in p["b1"]:
        y1 = apply_inception(y1, m)
    return y0 + upsample_bilinear_x2(y1)


def init_channels2(key):
    ks = jax.random.split(key, 7)
    return {"b0": [make_inception(ks[0], 256, CFG_STD64),
                   make_inception(ks[1], 256, CFG_64_11)],
            "b1_pre": [make_inception(ks[2], 256, CFG_STD64),
                       make_inception(ks[3], 256, CFG_STD64)],
            "c1": init_channels1(ks[4]),
            "b1_post": [make_inception(ks[5], 256, CFG_STD64),
                        make_inception(ks[6], 256, CFG_64_11)]}


def channels2_forward(x, p):
    y0 = x
    for m in p["b0"]:
        y0 = apply_inception(y0, m)
    y1 = avg_pool2(x)
    for m in p["b1_pre"]:
        y1 = apply_inception(y1, m)
    y1 = channels1_forward(y1, p["c1"])
    for m in p["b1_post"]:
        y1 = apply_inception(y1, m)
    return y0 + upsample_bilinear_x2(y1)


def init_channels3(key):
    ks = jax.random.split(key, 7)
    return {"b0_pre": [make_inception(ks[0], 128, CFG_STD32),
                       make_inception(ks[1], 128, CFG_STD64)],
            "c2": init_channels2(ks[2]),
            "b0_post": [make_inception(ks[3], 256, CFG_STD64),
                        make_inception(ks[4], 256, CFG_STD32)],
            "b1": [make_inception(ks[5], 128, CFG_STD32),
                   make_inception(ks[6], 128, CFG_32_11)]}


def channels3_forward(x_nchw, p):
    """Channels3.forward: list[0](x) + list[1](x).  NCHW in/out to match PyTorch."""
    x = jnp.transpose(x_nchw, (0, 2, 3, 1))                 # NCHW -> NHWC internally
    # branch 0: AvgPool -> incep -> incep -> Channels2 -> incep -> incep -> Upsample
    y0 = avg_pool2(x)
    for m in p["b0_pre"]:
        y0 = apply_inception(y0, m)
    y0 = channels2_forward(y0, p["c2"])
    for m in p["b0_post"]:
        y0 = apply_inception(y0, m)
    y0 = upsample_bilinear_x2(y0)
    # branch 1: incep -> incep
    y1 = x
    for m in p["b1"]:
        y1 = apply_inception(y1, m)
    return jnp.transpose(y0 + y1, (0, 3, 1, 2))             # NHWC -> NCHW


# ----------------------------------------------------------------------------
if __name__ == "__main__":
    key = jax.random.PRNGKey(0)
    kx, kp = jax.random.split(key)

    # Channels3's forward implies 128 input channels and spatial dims divisible by 8
    # (three nested AvgPool2d(2) levels).  Keep it small: (1, 128, 16, 16).
    n, c, h, w = 1, 128, 16, 16
    x = jax.random.normal(kx, (n, c, h, w), jnp.float32)
    params = init_channels3(kp)

    y = channels3_forward(x, params)
    jax.block_until_ready(y)

    assert y.shape == (n, 128, h, w), y.shape
    assert bool(jnp.all(jnp.isfinite(y)))
    assert bool(jnp.all(y >= 0.0))      # sums / bilinear interp of ReLU outputs stay >= 0

    print("KERNEL_OK")
</pallas_src>

<mosaic_0001>
module attributes {stable_mosaic.version = 11 : i64} {
  func.func @kernel(%arg0: i32, %arg1: memref<64x128xbf16, #tpu.memory_space<vmem>>, %arg2: memref<128x128xbf16, #tpu.memory_space<vmem>>, %arg3: memref<2x128xf32, #tpu.memory_space<vmem>>, %arg4: memref<64x2xf32, #tpu.memory_space<vmem>>, %arg5: memref<64x128xf32, #tpu.memory_space<vmem>>, %arg6: memref<1x2x128xf32, #tpu.memory_space<vmem>>) attributes {dimension_semantics = [#tpu.dimension_semantics<parallel>], iteration_bounds = array<i64: 1>, scalar_prefetch = 0 : i64, scratch_operands = 0 : i64, tpu.core_type = #tpu.core_type<tc>, window_params = [{transform_indices = @transform_0, window_bounds = array<i64: 64, 128>}, {pipeline_mode = #tpu.pipeline_mode<synchronous>, transform_indices = @transform_1, window_bounds = array<i64: 128, 128>}, {pipeline_mode = #tpu.pipeline_mode<synchronous>, transform_indices = @transform_2, window_bounds = array<i64: 2, 128>}, {transform_indices = @transform_3, window_bounds = array<i64: 64, 2>}, {transform_indices = @transform_4, window_bounds = array<i64: 64, 128>}, {transform_indices = @transform_5, window_bounds = array<i64: 1, 2, 128>}]} {
    %c0 = arith.constant 0 : index
    %c0_0 = arith.constant 0 : index
    %0 = vector.load %arg1[%c0, %c0_0] : memref<64x128xbf16, #tpu.memory_space<vmem>>, vector<64x128xbf16>
    %c0_1 = arith.constant 0 : index
    %c0_2 = arith.constant 0 : index
    %1 = vector.load %arg2[%c0_1, %c0_2] : memref<128x128xbf16, #tpu.memory_space<vmem>>, vector<128x128xbf16>
    %cst = arith.constant dense<0.000000e+00> : vector<64x128xf32>
    %2 = tpu.matmul %0, %1, %cst {dimension_numbers = #tpu.dot_dimension_numbers<[1], [0], [0], [1], [0, 0, 1, 1], [], []>} : vector<64x128xbf16>, vector<128x128xbf16>, vector<64x128xf32> -> vector<64x128xf32>
    %c0_3 = arith.constant 0 : index
    %c0_4 = arith.constant 0 : index
    %3 = vector.load %arg4[%c0_3, %c0_4] : memref<64x2xf32, #tpu.memory_space<vmem>>, vector<64x2xf32>
    %4 = vector.extract_strided_slice %3 {offsets = [0, 0], sizes = [64, 1], strides = [1, 1]} : vector<64x2xf32> to vector<64x1xf32>
    %c0_5 = arith.constant 0 : index
    %c0_6 = arith.constant 0 : index
    %5 = vector.load %arg3[%c0_5, %c0_6] : memref<2x128xf32, #tpu.memory_space<vmem>>, vector<1x128xf32>
    %6 = vector.broadcast %4 : vector<64x1xf32> to vector<64x128xf32>
    %7 = vector.broadcast %5 : vector<1x128xf32> to vector<64x128xf32>
    %8 = arith.mulf %6, %7 : vector<64x128xf32>
    %9 = arith.addf %2, %8 : vector<64x128xf32>
    %10 = vector.extract_strided_slice %3 {offsets = [0, 1], sizes = [64, 1], strides = [1, 1]} : vector<64x2xf32> to vector<64x1xf32>
    %c1 = arith.constant 1 : index
    %c0_7 = arith.constant 0 : index
    %11 = vector.load %arg3[%c1, %c0_7] : memref<2x128xf32, #tpu.memory_space<vmem>>, vector<1x128xf32>
    %12 = vector.broadcast %10 : vector<64x1xf32> to vector<64x128xf32>
    %13 = vector.broadcast %11 : vector<1x128xf32> to vector<64x128xf32>
    %14 = arith.mulf %12, %13 : vector<64x128xf32>
    %15 = arith.addf %9, %14 : vector<64x128xf32>
    %c0_8 = arith.constant 0 : index
    %c0_9 = arith.constant 0 : index
    %16 = vector.load %arg5[%c0_8, %c0_9] : memref<64x128xf32, #tpu.memory_space<vmem>>, vector<64x128xf32>
    tpu.vector_store %arg5[%c0_8, %c0_9], %15 {strides = array<i32>} : memref<64x128xf32, #tpu.memory_space<vmem>>, vector<64x128xf32>,
    %cst_10 = arith.constant dense<0.000000e+00> : vector<128xf32>
    %17 = vector.multi_reduction <add>, %15, %cst_10 [0] : vector<64x128xf32> to vector<128xf32>
    %18 = vector.shape_cast %17 : vector<128xf32> to vector<1x128xf32>
    %c0_11 = arith.constant 0 : index
    %c0_12 = arith.constant 0 : index
    %c0_13 = arith.constant 0 : index
    %19 = vector.load %arg6[%c0_11, %c0_12, %c0_13] : memref<1x2x128xf32, #tpu.memory_space<vmem>>, vector<1x1x128xf32>
    %20 = vector.shape_cast %19 : vector<1x1x128xf32> to vector<1x128xf32>
    %21 = vector.shape_cast %18 : vector<1x128xf32> to vector<1x1x128xf32>
    tpu.vector_store %arg6[%c0_11, %c0_12, %c0_13], %21 {strides = array<i32>} : memref<1x2x128xf32, #tpu.memory_space<vmem>>, vector<1x1x128xf32>,
    %22 = arith.mulf %15, %15 : vector<64x128xf32>
    %cst_14 = arith.constant dense<0.000000e+00> : vector<128xf32>
    %23 = vector.multi_reduction <add>, %22, %cst_14 [0] : vector<64x128xf32> to vector<128xf32>
    %24 = vector.shape_cast %23 : vector<128xf32> to vector<1x128xf32>
    %c0_15 = arith.constant 0 : index
    %c1_16 = arith.constant 1 : index
    %c0_17 = arith.constant 0 : index
    %25 = vector.load %arg6[%c0_15, %c1_16, %c0_17] : memref<1x2x128xf32, #tpu.memory_space<vmem>>, vector<1x1x128xf32>
    %26 = vector.shape_cast %25 : vector<1x1x128xf32> to vector<1x128xf32>
    %27 = vector.shape_cast %24 : vector<1x128xf32> to vector<1x1x128xf32>
    tpu.vector_store %arg6[%c0_15, %c1_16, %c0_17], %27 {strides = array<i32>} : memref<1x2x128xf32, #tpu.memory_space<vmem>>, vector<1x1x128xf32>,
    return
  }
  func.func @transform_0(%arg0: i32) -> (i32, i32) {
    %c0_i32 = arith.constant 0 : i32
    %c0_i32_0 = arith.constant 0 : i32
    return %arg0, %c0_i32 : i32, i32
  }
  func.func @transform_1(%arg0: i32) -> (i32, i32) {
    %c0_i32 = arith.constant 0 : i32
    %c0_i32_0 = arith.constant 0 : i32
    %c0_i32_1 = arith.constant 0 : i32
    return %c0_i32, %c0_i32_0 : i32, i32
  }
  func.func @transform_2(%arg0: i32) -> (i32, i32) {
    %c0_i32 = arith.constant 0 : i32
    %c0_i32_0 = arith.constant 0 : i32
    %c0_i32_1 = arith.constant 0 : i32
    return %c0_i32, %c0_i32_0 : i32, i32
  }
  func.func @transform_3(%arg0: i32) -> (i32, i32) {
    %c0_i32 = arith.constant 0 : i32
    %c0_i32_0 = arith.constant 0 : i32
    return %arg0, %c0_i32 : i32, i32
  }
  func.func @transform_4(%arg0: i32) -> (i32, i32) {
    %c0_i32 = arith.constant 0 : i32
    %c0_i32_0 = arith.constant 0 : i32
    return %arg0, %c0_i32 : i32, i32
  }
  func.func @transform_5(%arg0: i32) -> (i32, i32, i32) {
    %c0_i32 = arith.constant 0 : i32
    %c0_i32_0 = arith.constant 0 : i32
    %c0_i32_1 = arith.constant 0 : i32
    return %arg0, %c0_i32, %c0_i32_0 : i32, i32, i32
  }
}

</mosaic_0001>

<llo_original>
// kernel: tpu_custom_call.1
$region0: #{tpu_custom_call.1}
  #allocation0 [shape = 'u32[]', space=smem, size = 0x4, offset = 0x4, fixed_abs, tag = 'smem constant byte address 0x4 - core index']
  #allocation1 [shape = 'u32[144,128]{1,0:T(1,128)}', space=vmem, size = 0x12000, scoped, tag = 'internal scratch']
  %s0 = inlined_call_operand.hbm [shape: bf16[64,128], index: 0, kind: input, shape index: {}]
  %s1 = inlined_call_operand.vmem [shape: bf16[128,128], index: 1, kind: input, shape index: {}]
  %s2 = inlined_call_operand.vmem [shape: f32[2,128], index: 2, kind: input, shape index: {}]
  %s3 = inlined_call_operand.vmem [shape: f32[64,2], index: 3, kind: input, shape index: {}]
  %s4 = inlined_call_operand.hbm [shape: f32[64,128], index: 4, kind: output, shape index: {0}]
  %s5 = inlined_call_operand.hbm [shape: f32[1,2,128], index: 5, kind: output, shape index: {1}]
  %6 = xla_tuple %s4, %s5
  %s7 = sld [smem:[#allocation0]]
  $region38: #{tpu_custom_call.1} parent=0
    _
  %s9 = ssub.s32 1, %s7
  %s10 = scalar_select 0, %s9, %s7
  $region1: #{tpu_custom_call.1} parent=0
    #allocation2 [shape = 'u8[16384]{0}', space=vmem, size = 0x4000, scoped, tag = 'input window, operand 0, single buffered']
    #allocation3 [shape = 's32[1]{0}', space=sflag, size = 0x4, scoped, tag = 'scoped memory for tpu_custom_call.1']
    #allocation4 [shape = 's32[1]{0}', space=sflag, size = 0x4, scoped, tag = 'scoped memory for tpu_custom_call.1']
    #allocation5 [shape = 'u8[32768]{0}', space=vmem, size = 0x8000, scoped, tag = 'output window, operand 0, single buffered']
    #allocation6 [shape = 'u8[1024]{0}', space=vmem, size = 0x400, scoped, tag = 'output window, operand 1, single buffered']
    #allocation7 [shape = 's32[1]{0}', space=sflag, size = 0x4, scoped, tag = 'scoped memory for tpu_custom_call.1']
    %11 = vsyncpa [#allocation3], 0
    %12 = vsyncpa [#allocation4], 0
    %13 = vsyncpa [#allocation7], 0
    // Predicated region
    $region2: #{tpu_custom_call.1} parent=1 // pred_check
      _
    $region3: #{tpu_custom_call.1} parent=1 // pred_check_branch
      %15 = sbr.rel (0) target = $region5
    $region4: #{tpu_custom_call.1} parent=1 // pred_region
      %s17 = ssub.s32 512, 512
      %18 = vsyncadd [#allocation3], %s17
      %s19 = sshll.u32 [#allocation2], 4
      %s20 = int_to_ptr.vmem [resolvable:$true] %s19
      %25 = dma.hbm_to_vmem [thread:$0]  %s0, 512, %s20, [#allocation3], 64, 64, 4
    $region5: #{tpu_custom_call.1} parent=1 // pred_fallthru
      _
    // Predicated region
    $region6: #{tpu_custom_call.1} parent=1 // pred_check
      _
    $region7: #{tpu_custom_call.1} parent=1 // pred_check_branch
      %27 = sbr.rel (0) target = $region9
    $region8: #{tpu_custom_call.1} parent=1 // pred_region
      _
    $region9: #{tpu_custom_call.1} parent=1 // pred_fallthru
      _
    // Predicated region
    $region10: #{tpu_custom_call.1} parent=1 // pred_check
      _
    $region11: #{tpu_custom_call.1} parent=1 // pred_check_branch
      %29 = sbr.rel (0) target = $region13
    $region12: #{tpu_custom_call.1} parent=1 // pred_region
      _
    $region13: #{tpu_custom_call.1} parent=1 // pred_fallthru
      _
    // Predicated region
    $region14: #{tpu_custom_call.1} parent=1 // pred_check
      _
    $region15: #{tpu_custom_call.1} parent=1 // pred_check_branch
      %31 = sbr.rel (0) target = $region17
    $region16: #{tpu_custom_call.1} parent=1 // pred_region
      _
    $region17: #{tpu_custom_call.1} parent=1 // pred_fallthru
      _
    // Predicated region
    $region18: #{tpu_custom_call.1} parent=1 // pred_check
      _
    $region19: #{tpu_custom_call.1} parent=1 // pred_check_branch
      %33 = sbr.rel (0) target = $region21
    $region20: #{tpu_custom_call.1} parent=1 // pred_region
      %34 = dma.done [#allocation3], 512
    $region21: #{tpu_custom_call.1} parent=1 // pred_fallthru
      _
    %v36 = vld [vmem:[#allocation2] sm:$0xf]
    %v37 = vld [vmem:[#allocation2 + $0x4] sm:$0xf]
    %v38 = vld [vmem:[#allocation2 + $0x8] sm:$0xf]
    %v39 = vld [vmem:[#allocation2 + $0xc] sm:$0xf]
    %v40 = vld [vmem:[#allocation2 + $0x10] sm:$0xf]
    %v41 = vld [vmem:[#allocation2 + $0x14] sm:$0xf]
    %v42 = vld [vmem:[#allocation2 + $0x18] sm:$0xf]
    %v43 = vld [vmem:[#allocation2 + $0x1c] sm:$0xf]
    %v44 = vld [vmem:[%s1] sm:$0xf]
    %v45 = vld [vmem:[%s1 + $0x4] sm:$0xf]
    %v46 = vld [vmem:[%s1 + $0x8] sm:$0xf]
    %v47 = vld [vmem:[%s1 + $0xc] sm:$0xf]
    %v48 = vld [vmem:[%s1 + $0x10] sm:$0xf]
    %v49 = vld [vmem:[%s1 + $0x14] sm:$0xf]
    %v50 = vld [vmem:[%s1 + $0x18] sm:$0xf]
    %v51 = vld [vmem:[%s1 + $0x1c] sm:$0xf]
    %v52 = vld [vmem:[%s1 + $0x20] sm:$0xf]
    %v53 = vld [vmem:[%s1 + $0x24] sm:$0xf]
    %v54 = vld [vmem:[%s1 + $0x28] sm:$0xf]
    %v55 = vld [vmem:[%s1 + $0x2c] sm:$0xf]
    %v56 = vld [vmem:[%s1 + $0x30] sm:$0xf]
    %v57 = vld [vmem:[%s1 + $0x34] sm:$0xf]
    %v58 = vld [vmem:[%s1 + $0x38] sm:$0xf]
    %v59 = vld [vmem:[%s1 + $0x3c] sm:$0xf]
    %v60 = vld [vmem:[%s3] sm:$0xff]
    %v61 = vld [vmem:[%s3 + $0x8] sm:$0xff]
    %v62 = vld [vmem:[%s3 + $0x10] sm:$0xff]
    %v63 = vld [vmem:[%s3 + $0x18] sm:$0xff]
    %v64 = vld [vmem:[%s3 + $0x20] sm:$0xff]
    %v65 = vld [vmem:[%s3 + $0x28] sm:$0xff]
    %v66 = vld [vmem:[%s3 + $0x30] sm:$0xff]
    %v67 = vld [vmem:[%s3 + $0x38] sm:$0xff]
    %v68 = vld [vmem:[%s2] sm:$0x1]
    %70 = vset.pattern.permute.xlu0 0
    %71 = vperm.xlu0 %70, %v60
    %v72 = vpop.permute.xlu0 %71
    %75 = vset.pattern.permute.xlu0 0
    %76 = vperm.xlu0 %75, %v61
    %v77 = vpop.permute.xlu0 %76
    %80 = vset.pattern.permute.xlu0 0
    %81 = vperm.xlu0 %80, %v62
    %v82 = vpop.permute.xlu0 %81
    %85 = vset.pattern.permute.xlu0 0
    %86 = vperm.xlu0 %85, %v63
    %v87 = vpop.permute.xlu0 %86
    %90 = vset.pattern.permute.xlu0 0
    %91 = vperm.xlu0 %90, %v64
    %v92 = vpop.permute.xlu0 %91
    %95 = vset.pattern.permute.xlu0 0
    %96 = vperm.xlu0 %95, %v65
    %v97 = vpop.permute.xlu0 %96
    %100 = vset.pattern.permute.xlu0 0
    %101 = vperm.xlu0 %100, %v66
    %v102 = vpop.permute.xlu0 %101
    %105 = vset.pattern.permute.xlu0 0
    %106 = vperm.xlu0 %105, %v67
    %v107 = vpop.permute.xlu0 %106
    %v109 = vlaneseq
    %v110 = vshrl.u32 %v109, 7
    %v111 = vsub.s32 0, %v110
    %v112 = vrot.slane %v68, %v111
    %v113 = vmul.f32 %v72, %v112
    %v114 = vmul.f32 %v77, %v112
    %v115 = vmul.f32 %v82, %v112
    %v116 = vmul.f32 %v87, %v112
    %v117 = vmul.f32 %v92, %v112
    %v118 = vmul.f32 %v97, %v112
    %v119 = vmul.f32 %v102, %v112
    %v120 = vmul.f32 %v107, %v112
    %v129 = vunpack.c.l.b16 %v36
    %v130 = vunpack.c.l.b16 %v37
    %v131 = vunpack.c.l.b16 %v38
    %v132 = vunpack.c.l.b16 %v39
    %v133 = vunpack.c.l.b16 %v40
    %v134 = vunpack.c.l.b16 %v41
    %v135 = vunpack.c.l.b16 %v42
    %v136 = vunpack.c.l.b16 %v43
    %v137 = vpack.c.b16 %v130, %v129
    %v138 = vpack.c.b16 %v132, %v131
    %v139 = vpack.c.b16 %v134, %v133
    %v140 = vpack.c.b16 %v136, %v135
    %v161 = vunpack.c.l.b16 %v44
    %v162 = vunpack.c.l.b16 %v45
    %v163 = vunpack.c.l.b16 %v46
    %v164 = vunpack.c.l.b16 %v47
    %v165 = vunpack.c.l.b16 %v48
    %v166 = vunpack.c.l.b16 %v49
    %v167 = vunpack.c.l.b16 %v50
    %v168 = vunpack.c.l.b16 %v51
    %v169 = vunpack.c.l.b16 %v52
    %v170 = vunpack.c.l.b16 %v53
    %v171 = vunpack.c.l.b16 %v54
    %v172 = vunpack.c.l.b16 %v55
    %v173 = vunpack.c.l.b16 %v56
    %v174 = vunpack.c.l.b16 %v57
    %v175 = vunpack.c.l.b16 %v58
    %v176 = vunpack.c.l.b16 %v59
    %v177 = vpack.c.b16 %v162, %v161
    %v178 = vpack.c.b16 %v164, %v163
    %v179 = vpack.c.b16 %v166, %v165
    %v180 = vpack.c.b16 %v168, %v167
    %v181 = vpack.c.b16 %v170, %v169
    %v182 = vpack.c.b16 %v172, %v171
    %v183 = vpack.c.b16 %v174, %v173
    %v184 = vpack.c.b16 %v176, %v175
    %193 = vmatprep.subr.bf16.mxu0 0
    %194 = vmatpush1.bf16.msra.mxu0 %v184
    %195 = vmatprep.subr.bf16.mxu0 0
    %196 = vmatpush1.bf16.msra.mxu0 %v183
    %197 = vmatprep.subr.bf16.mxu0 0
    %198 = vmatpush1.bf16.msra.mxu0 %v182
    %199 = vmatprep.subr.bf16.mxu0 0
    %200 = vmatpush1.bf16.msra.mxu0 %v181
    %201 = vmatprep.subr.bf16.mxu0 0
    %202 = vmatpush1.bf16.msra.mxu0 %v180
    %203 = vmatprep.subr.bf16.mxu0 0
    %204 = vmatpush1.bf16.msra.mxu0 %v179
    %205 = vmatprep.subr.bf16.mxu0 0
    %206 = vmatpush1.bf16.msra.mxu0 %v178
    %207 = vmatprep.subr.bf16.mxu0 0
    %208 = vmatpush1.bf16.msra.mxu0 %v177
    %209 = vmatprep.subr.bf16.mxu0 0
    %210 = vmatpush2.bf16.msra.mxu0 0
    %211 = vmatprep.subr.bf16.mxu0 0
    %212 = vmatpush2.bf16.msra.mxu0 0
    %213 = vmatprep.subr.bf16.mxu0 0
    %214 = vmatpush2.bf16.msra.mxu0 0
    %215 = vmatprep.subr.bf16.mxu0 0
    %216 = vmatpush2.bf16.msra.mxu0 0
    %217 = vmatprep.subr.bf16.mxu0 0
    %218 = vmatpush2.bf16.msra.mxu0 0
    %219 = vmatprep.subr.bf16.mxu0 0
    %220 = vmatpush2.bf16.msra.mxu0 0
    %221 = vmatprep.subr.bf16.mxu0 0
    %222 = vmatpush2.bf16.msra.mxu0 0
    %223 = vmatprep.subr.bf16.mxu0 0
    %224 = vmatpush2.bf16.msra.mxu0 0
    %225 = vmatprep.mubr.bf16.mxu0 0
    %226 = vmatmul.mubr.bf16.gmra.mxu0 %v137
    %v227 = vpop.f32.mrf.mxu0
    %v228 = vadd.f32 %v113, %v227
    %v229 = vpop.f32.mrf.mxu0
    %v230 = vpop.f32.mrf.mxu0
    %v231 = vadd.f32 %v114, %v230
    %v232 = vpop.f32.mrf.mxu0
    %233 = vmatprep.mubr.bf16.mxu0 0
    %234 = vmatmul.mubr.bf16.gmra.mxu0 %v138
    %v235 = vpop.f32.mrf.mxu0
    %v236 = vadd.f32 %v115, %v235
    %v237 = vpop.f32.mrf.mxu0
    %v238 = vpop.f32.mrf.mxu0
    %v239 = vadd.f32 %v116, %v238
    %v240 = vpop.f32.mrf.mxu0
    %241 = vmatprep.mubr.bf16.mxu0 0
    %242 = vmatmul.mubr.bf16.gmra.mxu0 %v139
    %v243 = vpop.f32.mrf.mxu0
    %v244 = vadd.f32 %v117, %v243
    %v245 = vpop.f32.mrf.mxu0
    %v246 = vpop.f32.mrf.mxu0
    %v247 = vadd.f32 %v118, %v246
    %v248 = vpop.f32.mrf.mxu0
    %249 = vmatprep.mubr.bf16.mxu0 0
    %250 = vmatmul.mubr.bf16.gmra.mxu0 %v140
    %v251 = vpop.f32.mrf.mxu0
    %v252 = vadd.f32 %v119, %v251
    %v253 = vpop.f32.mrf.mxu0
    %v254 = vpop.f32.mrf.mxu0
    %v255 = vadd.f32 %v120, %v254
    %v256 = vpop.f32.mrf.mxu0
    %257 = vdwg.mxu0
    %v258 = vld [vmem:[%s2 + $0x1] sm:$0x1]
    %259 = vset.pattern.permute.xlu0 1
    %260 = vperm.xlu0 %259, %v60
    %v261 = vpop.permute.xlu0 %260
    %263 = vset.pattern.permute.xlu0 1
    %264 = vperm.xlu0 %263, %v61
    %v265 = vpop.permute.xlu0 %264
    %267 = vset.pattern.permute.xlu0 1
    %268 = vperm.xlu0 %267, %v62
    %v269 = vpop.permute.xlu0 %268
    %271 = vset.pattern.permute.xlu0 1
    %272 = vperm.xlu0 %271, %v63
    %v273 = vpop.permute.xlu0 %272
    %275 = vset.pattern.permute.xlu0 1
    %276 = vperm.xlu0 %275, %v64
    %v277 = vpop.permute.xlu0 %276
    %279 = vset.pattern.permute.xlu0 1
    %280 = vperm.xlu0 %279, %v65
    %v281 = vpop.permute.xlu0 %280
    %283 = vset.pattern.permute.xlu0 1
    %284 = vperm.xlu0 %283, %v66
    %v285 = vpop.permute.xlu0 %284
    %287 = vset.pattern.permute.xlu0 1
    %288 = vperm.xlu0 %287, %v67
    %v289 = vpop.permute.xlu0 %288
    %v291 = vlaneseq
    %v292 = vshrl.u32 %v291, 7
    %v293 = vsub.s32 0, %v292
    %v294 = vrot.slane %v258, %v293
    %v295 = vmul.f32 %v261, %v294
    %v296 = vmul.f32 %v265, %v294
    %v297 = vmul.f32 %v269, %v294
    %v298 = vmul.f32 %v273, %v294
    %v299 = vmul.f32 %v277, %v294
    %v300 = vmul.f32 %v281, %v294
    %v301 = vmul.f32 %v285, %v294
    %v302 = vmul.f32 %v289, %v294
    %v303 = vadd.f32 %v228, %v295
    %v304 = vadd.f32 %v231, %v296
    %v305 = vadd.f32 %v236, %v297
    %v306 = vadd.f32 %v239, %v298
    %v307 = vadd.f32 %v244, %v299
    %v308 = vadd.f32 %v247, %v300
    %v309 = vadd.f32 %v252, %v301
    %v310 = vadd.f32 %v255, %v302
    %311 = vst [vmem:[#allocation5] sm:$0xff] %v303
    %312 = vst [vmem:[#allocation5 + $0x8] sm:$0xff] %v304
    %313 = vst [vmem:[#allocation5 + $0x10] sm:$0xff] %v305
    %314 = vst [vmem:[#allocation5 + $0x18] sm:$0xff] %v306
    %315 = vst [vmem:[#allocation5 + $0x20] sm:$0xff] %v307
    %316 = vst [vmem:[#allocation5 + $0x28] sm:$0xff] %v308
    %317 = vst [vmem:[#allocation5 + $0x30] sm:$0xff] %v309
    %318 = vst [vmem:[#allocation5 + $0x38] sm:$0xff] %v310
    %v319 = vadd.f32 %v303, %v304
    %v320 = vadd.f32 %v319, %v305
    %v321 = vadd.f32 %v320, %v306
    %v322 = vadd.f32 %v321, %v307
    %v323 = vadd.f32 %v322, %v308
    %v324 = vadd.f32 %v323, %v309
    %v325 = vadd.f32 %v324, %v310
    %v326 = vrot.slane %v325, 4
    %v327 = vadd.f32 %v325, %v326
    %v328 = vrot.slane %v327, 2
    %v329 = vadd.f32 %v327, %v328
    %v330 = vrot.slane %v329, 1
    %v331 = vadd.f32 %v329, %v330
    %332 = vst [vmem:[#allocation6] sm:$0x1] %v331
    %v333 = vmul.f32 %v303, %v303
    %v334 = vmul.f32 %v304, %v304
    %v335 = vmul.f32 %v305, %v305
    %v336 = vmul.f32 %v306, %v306
    %v337 = vmul.f32 %v307, %v307
    %v338 = vmul.f32 %v308, %v308
    %v339 = vmul.f32 %v309, %v309
    %v340 = vmul.f32 %v310, %v310
    %v341 = vadd.f32 %v333, %v334
    %v342 = vadd.f32 %v341, %v335
    %v343 = vadd.f32 %v342, %v336
    %v344 = vadd.f32 %v343, %v337
    %v345 = vadd.f32 %v344, %v338
    %v346 = vadd.f32 %v345, %v339
    %v347 = vadd.f32 %v346, %v340
    %v348 = vrot.slane %v347, 4
    %v349 = vadd.f32 %v347, %v348
    %v350 = vrot.slane %v349, 2
    %v351 = vadd.f32 %v349, %v350
    %v352 = vrot.slane %v351, 1
    %v353 = vadd.f32 %v351, %v352
    %354 = vst [vmem:[#allocation6 + $0x1] sm:$0x1] %v353
    // Predicated region
    $region22: #{tpu_custom_call.1} parent=1 // pred_check
      _
    $region23: #{tpu_custom_call.1} parent=1 // pred_check_branch
      %356 = sbr.rel (0) target = $region25
    $region24: #{tpu_custom_call.1} parent=1 // pred_region
      %s358 = ssub.s32 1024, 1024
      %359 = vsyncadd [#allocation4], %s358
      %s360 = sshll.u32 [#allocation5], 4
      %s361 = int_to_ptr.vmem [resolvable:$true] %s360
      %366 = dma.vmem_to_hbm [thread:$0]  %s361, 1024, %s4, [#allocation4], 128, 128, 8
    $region25: #{tpu_custom_call.1} parent=1 // pred_fallthru
      _
    // Predicated region
    $region26: #{tpu_custom_call.1} parent=1 // pred_check
      _
    $region27: #{tpu_custom_call.1} parent=1 // pred_check_branch
      %368 = sbr.rel (0) target = $region29
    $region28: #{tpu_custom_call.1} parent=1 // pred_region
      %s370 = ssub.s32 32, 32
      %371 = vsyncadd [#allocation7], %s370
      %s373 = sshll.u32 [#allocation6], 4
      %s374 = int_to_ptr.vmem [resolvable:$true] %s373
      %376 = dma.vmem_to_hbm [thread:$0]  %s374, 32, %s5, [#allocation7]
    $region29: #{tpu_custom_call.1} parent=1 // pred_fallthru
      _
    // Predicated region
    $region30: #{tpu_custom_call.1} parent=1 // pred_check
      _
    $region31: #{tpu_custom_call.1} parent=1 // pred_check_branch
      %378 = sbr.rel (0) target = $region33
    $region32: #{tpu_custom_call.1} parent=1 // pred_region
      %379 = dma.done [#allocation4], 1024
    $region33: #{tpu_custom_call.1} parent=1 // pred_fallthru
      _
    // Predicated region
    $region34: #{tpu_custom_call.1} parent=1 // pred_check
      _
    $region35: #{tpu_custom_call.1} parent=1 // pred_check_branch
      %381 = sbr.rel (0) target = $region37
    $region36: #{tpu_custom_call.1} parent=1 // pred_region
      %382 = dma.done [#allocation7], 32
    $region37: #{tpu_custom_call.1} parent=1 // pred_fallthru
      _
    %383 = vsyncpa [#allocation3], 1
    %384 = vsyncpa [#allocation4], 1
    %385 = vsyncpa [#allocation7], 1

</llo_original>
